<compile_context>
chip_gen: v7x
topology: tpu7x:2x2x1
jax: 0.10.0
libtpu: 0.0.40
codegen_flags: <defaults>
</compile_context>

<pallas_src>
import numpy as np

import jax
import jax.numpy as jnp
from jax.experimental import pallas as pl
from jax.experimental.pallas import tpu as pltpu


# --------------------------------------------------------------------------- kernel
def _action_encoder_kernel(
    group_cat_ref,              # scalar prefetch (SMEM): (num_groups,) int32, used by index_maps
    act_ref,                    # (G, T, A)   actions, schedule order (single category per block)
    bias2_ref,                  # (G, 1, H)   per-sample fused bias = tau @ W2b[cat] + b2[cat]
    w1_ref, b1_ref,             # (1, A, H), (1, 1, H)
    w2a_ref,                    # (1, H, H)   rows of W2 that multiply a_emb
    w3_ref, b3_ref,             # (1, H, H), (1, 1, H)
    out_ref,                    # (G, T, H)
):
    G, T, A = act_ref.shape
    H = out_ref.shape[-1]
    rows = G * T

    # a_emb = actions @ W1[cat] + b1[cat]        -- one (G*T, A) x (A, H) matmul
    a_flat = act_ref[...].reshape(rows, A)
    a_emb = jnp.dot(a_flat, w1_ref[0], preferred_element_type=jnp.float32) + b1_ref[0]

    # concat-free W2: [a_emb | tau] @ W2 == a_emb @ W2a + (tau @ W2b)
    # the second term is per-sample-constant across T and was folded into bias2.
    h = jnp.dot(a_emb, w2a_ref[0], preferred_element_type=jnp.float32)
    h = h.reshape(G, T, H) + bias2_ref[...]                  # (G,1,H) broadcasts over T
    h = h * (1.0 / (1.0 + jnp.exp(-h)))                      # swish / SiLU (exp on EUP)

    out = jnp.dot(h.reshape(rows, H), w3_ref[0],
                  preferred_element_type=jnp.float32) + b3_ref[0]
    out_ref[...] = out.reshape(G, T, H).astype(out_ref.dtype)


# -------------------------------------------------------------- host-side group schedule
def _build_schedule(cat_np, group_size, batch):
    """Group samples by category into fixed-size, single-category groups.

    Returns:
      slot_sample: (S_pad,) int32  original sample index occupying each schedule slot
                                   (padding slots point at sample 0 and are discarded)
      group_cat:   (num_groups,) int32  category id of each group
      out_pos:     (B,) int32     schedule slot holding each original sample's output
    """
    slots, group_cat = [], []
    out_pos = np.zeros((batch,), dtype=np.int32)
    pos = 0
    for c in np.unique(cat_np):
        idx = np.nonzero(cat_np == c)[0]
        n = idx.shape[0]
        n_groups_c = -(-n // group_size)
        pad = n_groups_c * group_size - n
        slots.append(np.concatenate([idx, np.zeros((pad,), dtype=idx.dtype)]))
        group_cat.extend([int(c)] * n_groups_c)
        for j, s in enumerate(idx):
            out_pos[int(s)] = pos + j
        pos += n_groups_c * group_size
    slot_sample = np.concatenate(slots).astype(np.int32)
    return slot_sample, np.asarray(group_cat, dtype=np.int32), out_pos


def _sinusoidal_encoding(timesteps, dim):
    """Standard gr00t sinusoidal encoding: (B,) -> (B, dim) = [sin(t*f) | cos(t*f)]."""
    half = dim // 2
    exponent = -jnp.arange(half, dtype=jnp.float32) * (jnp.log(10000.0) / half)
    freqs = timesteps.astype(jnp.float32)[:, None] * jnp.exp(exponent)[None, :]
    return jnp.concatenate([jnp.sin(freqs), jnp.cos(freqs)], axis=-1)


# -------------------------------------------------------------------------- wrapper
def multi_embodiment_action_encoder(actions, timesteps, cat_ids, params, *, group_size=None):
    """Pallas forward.  Returns (B, T, hidden_size) float32."""
    B, T, A = actions.shape
    C, _, H = params["W1"].shape
    if timesteps.ndim != 1 or timesteps.shape[0] != B:
        raise ValueError("Expected `timesteps` to have shape (B,).")

    if group_size is None:
        group_size = max(1, 128 // T)          # aim for >= 128 MXU rows per grid step
    G = int(group_size)

    # Host-side MoE-style schedule: fixed-size, single-category groups of samples.
    cat_np = np.asarray(jax.device_get(cat_ids)).astype(np.int32)
    slot_sample, group_cat, out_pos = _build_schedule(cat_np, G, B)
    s_pad = int(slot_sample.shape[0])
    num_groups = s_pad // G
    n_cat_present = int(np.unique(cat_np).shape[0])

    # Fold the tau projection and b2 into one per-sample bias (wrapper-side, tiny):
    #   fused_b2[b] = tau[b] @ W2[cat[b]][H:, :] + b2[cat[b]]        shape (B, 1, H)
    tau = _sinusoidal_encoding(timesteps, H)[:, None, :]             # (B, 1, H)
    W2a = params["W2"][:, :H, :]
    W2b = params["W2"][:, H:, :]
    fused_b2 = jnp.einsum("boh,bhk->bok", tau, W2b[cat_ids],
                          precision=jax.lax.Precision.HIGHEST) + params["b2"][cat_ids]

    # Gather inputs into schedule order (contiguous single-category slabs).
    slot_idx = jnp.asarray(slot_sample)
    acts_s = jnp.take(actions.astype(jnp.float32), slot_idx, axis=0)  # (S_pad, T, A)
    bias_s = jnp.take(fused_b2, slot_idx, axis=0)                     # (S_pad, 1, H)

    grid_spec = pltpu.PrefetchScalarGridSpec(
        num_scalar_prefetch=1,
        grid=(num_groups,),
        in_specs=[
            pl.BlockSpec((G, T, A), lambda g, gc: (g, 0, 0)),         # actions (sched order)
            pl.BlockSpec((G, 1, H), lambda g, gc: (g, 0, 0)),         # fused per-sample bias
            pl.BlockSpec((1, A, H), lambda g, gc: (gc[g], 0, 0)),     # W1[cat]
            pl.BlockSpec((1, 1, H), lambda g, gc: (gc[g], 0, 0)),     # b1[cat]
            pl.BlockSpec((1, H, H), lambda g, gc: (gc[g], 0, 0)),     # W2a[cat]
            pl.BlockSpec((1, H, H), lambda g, gc: (gc[g], 0, 0)),     # W3[cat]
            pl.BlockSpec((1, 1, H), lambda g, gc: (gc[g], 0, 0)),     # b3[cat]
        ],
        out_specs=pl.BlockSpec((G, T, H), lambda g, gc: (g, 0, 0)),   # (G*T, 128) dense slab
    )

    flops = 2 * s_pad * T * H * (A + 2 * H)
    bytes_accessed = 4 * (s_pad * T * A + s_pad * H + s_pad * T * H
                          + n_cat_present * (A * H + 2 * H * H + 3 * H))
    cost = pl.CostEstimate(flops=int(flops),
                           transcendentals=int(s_pad * T * H),
                           bytes_accessed=int(bytes_accessed))

    out_padded = pl.pallas_call(
        _action_encoder_kernel,
        out_shape=jax.ShapeDtypeStruct((s_pad, T, H), jnp.float32),
        grid_spec=grid_spec,
        compiler_params=pltpu.CompilerParams(dimension_semantics=("parallel",)),
        cost_estimate=cost,
    )(
        jnp.asarray(group_cat),
        acts_s, bias_s,
        params["W1"], params["b1"],
        W2a,
        params["W3"], params["b3"],
    )

    # Drop padding rows and undo the schedule permutation.
    return jnp.take(out_padded, jnp.asarray(out_pos), axis=0)


# ------------------------------------------------------------------ params / reference
def init_params(key, num_embodiments, action_dim, hidden_size):
    k1, k2, k3, k4, k5, k6 = jax.random.split(key, 6)
    # NOTE: the PyTorch module inits biases to zero; small random biases are used here
    # so the self-test actually exercises the bias paths.  Forward semantics unchanged.
    # (Biases stored as (C, 1, H) so BlockSpec last-two dims cover full extents.)
    return dict(
        W1=(0.02 * jax.random.normal(k1, (num_embodiments, action_dim, hidden_size))
            ).astype(jnp.float32),
        b1=(0.1 * jax.random.normal(k4, (num_embodiments, 1, hidden_size))).astype(jnp.float32),
        W2=(0.02 * jax.random.normal(k2, (num_embodiments, 2 * hidden_size, hidden_size))
            ).astype(jnp.float32),
        b2=(0.1 * jax.random.normal(k5, (num_embodiments, 1, hidden_size))).astype(jnp.float32),
        W3=(0.02 * jax.random.normal(k3, (num_embodiments, hidden_size, hidden_size))
            ).astype(jnp.float32),
        b3=(0.1 * jax.random.normal(k6, (num_embodiments, 1, hidden_size))).astype(jnp.float32),
    )


def reference(actions, timesteps, cat_ids, p):
    """Pure-JAX reference mirroring the PyTorch forward."""
    B, T, _ = actions.shape
    H = p["W1"].shape[-1]
    hp = jax.lax.Precision.HIGHEST

    a_emb = jnp.einsum("bta,bah->bth", actions.astype(jnp.float32),
                       p["W1"][cat_ids], precision=hp) + p["b1"][cat_ids]

    t_exp = jnp.broadcast_to(timesteps.astype(jnp.float32)[:, None], (B, T))
    half = H // 2
    exponent = -jnp.arange(half, dtype=jnp.float32) * (jnp.log(10000.0) / half)
    freqs = t_exp[..., None] * jnp.exp(exponent)
    tau_emb = jnp.concatenate([jnp.sin(freqs), jnp.cos(freqs)], axis=-1)   # (B, T, H)

    x = jnp.concatenate([a_emb, tau_emb], axis=-1)                         # (B, T, 2H)
    h = jnp.einsum("btk,bkh->bth", x, p["W2"][cat_ids], precision=hp) + p["b2"][cat_ids]
    h = h * jax.nn.sigmoid(h)                                              # swish
    out = jnp.einsum("btk,bkh->bth", h, p["W3"][cat_ids], precision=hp) + p["b3"][cat_ids]
    return out


# ----------------------------------------------------------------------------- main
if __name__ == "__main__":
    B = 8
    T = 16
    action_dim = 32
    hidden_size = 128
    num_embodiments = 3

    key = jax.random.PRNGKey(0)
    kp, ka, kt, kc = jax.random.split(key, 4)

    params = init_params(kp, num_embodiments, action_dim, hidden_size)
    actions = jax.random.normal(ka, (B, T, action_dim), dtype=jnp.float32)
    timesteps = jax.random.uniform(kt, (B,), dtype=jnp.float32)
    cat_ids = jax.random.randint(kc, (B,), 0, num_embodiments, dtype=jnp.int32)

    out = multi_embodiment_action_encoder(actions, timesteps, cat_ids, params)
    out = jax.block_until_ready(out)

    ref = reference(actions, timesteps, cat_ids, params)
    assert out.shape == (B, T, hidden_size), out.shape
    max_err = float(jnp.max(jnp.abs(out - ref)))
    assert jnp.allclose(out, ref, atol=1e-3, rtol=1e-3), max_err

    print("KERNEL_OK")
</pallas_src>

<mosaic_0001>
module attributes {stable_mosaic.version = 11 : i64} {
  func.func @_action_encoder_kernel(%arg0: i32, %arg1: memref<3xi32, #tpu.memory_space<smem>>, %arg2: memref<8x16x32xf32, #tpu.memory_space<vmem>>, %arg3: memref<8x1x128xf32, #tpu.memory_space<vmem>>, %arg4: memref<1x32x128xf32, #tpu.memory_space<vmem>>, %arg5: memref<1x1x128xf32, #tpu.memory_space<vmem>>, %arg6: memref<1x128x128xf32, #tpu.memory_space<vmem>>, %arg7: memref<1x128x128xf32, #tpu.memory_space<vmem>>, %arg8: memref<1x1x128xf32, #tpu.memory_space<vmem>>, %arg9: memref<8x16x128xf32, #tpu.memory_space<vmem>>) attributes {dimension_semantics = [#tpu.dimension_semantics<parallel>], iteration_bounds = array<i64: 3>, scalar_prefetch = 1 : i64, scratch_operands = 0 : i64, tpu.core_type = #tpu.core_type<tc>, window_params = [{transform_indices = @transform_0, window_bounds = array<i64: 8, 16, 32>}, {transform_indices = @transform_1, window_bounds = array<i64: 8, 1, 128>}, {transform_indices = @transform_2, window_bounds = array<i64: 1, 32, 128>}, {transform_indices = @transform_3, window_bounds = array<i64: 1, 1, 128>}, {transform_indices = @transform_4, window_bounds = array<i64: 1, 128, 128>}, {transform_indices = @transform_5, window_bounds = array<i64: 1, 128, 128>}, {transform_indices = @transform_6, window_bounds = array<i64: 1, 1, 128>}, {transform_indices = @transform_7, window_bounds = array<i64: 8, 16, 128>}]} {
    %c0 = arith.constant 0 : index
    %c0_0 = arith.constant 0 : index
    %c0_1 = arith.constant 0 : index
    %0 = vector.load %arg2[%c0, %c0_0, %c0_1] : memref<8x16x32xf32, #tpu.memory_space<vmem>>, vector<8x16x32xf32>
    %1 = vector.shape_cast %0 : vector<8x16x32xf32> to vector<128x32xf32>
    %c0_2 = arith.constant 0 : index
    %c0_3 = arith.constant 0 : index
    %c0_4 = arith.constant 0 : index
    %2 = vector.load %arg4[%c0_2, %c0_3, %c0_4] : memref<1x32x128xf32, #tpu.memory_space<vmem>>, vector<1x32x128xf32>
    %3 = vector.shape_cast %2 : vector<1x32x128xf32> to vector<32x128xf32>
    %cst = arith.constant dense<0.000000e+00> : vector<128x128xf32>
    %4 = tpu.matmul %1, %3, %cst {dimension_numbers = #tpu.dot_dimension_numbers<[1], [0], [0], [1], [0, 0, 1, 1], [], []>} : vector<128x32xf32>, vector<32x128xf32>, vector<128x128xf32> -> vector<128x128xf32>
    %c0_5 = arith.constant 0 : index
    %c0_6 = arith.constant 0 : index
    %c0_7 = arith.constant 0 : index
    %5 = vector.load %arg5[%c0_5, %c0_6, %c0_7] : memref<1x1x128xf32, #tpu.memory_space<vmem>>, vector<1x1x128xf32>
    %6 = vector.shape_cast %5 : vector<1x1x128xf32> to vector<1x128xf32>
    %7 = vector.broadcast %6 : vector<1x128xf32> to vector<128x128xf32>
    %8 = arith.addf %4, %7 : vector<128x128xf32>
    %c0_8 = arith.constant 0 : index
    %c0_9 = arith.constant 0 : index
    %c0_10 = arith.constant 0 : index
    %9 = vector.load %arg6[%c0_8, %c0_9, %c0_10] : memref<1x128x128xf32, #tpu.memory_space<vmem>>, vector<1x128x128xf32>
    %10 = vector.shape_cast %9 : vector<1x128x128xf32> to vector<128x128xf32>
    %cst_11 = arith.constant dense<0.000000e+00> : vector<128x128xf32>
    %11 = tpu.matmul %8, %10, %cst_11 {dimension_numbers = #tpu.dot_dimension_numbers<[1], [0], [0], [1], [0, 0, 1, 1], [], []>} : vector<128x128xf32>, vector<128x128xf32>, vector<128x128xf32> -> vector<128x128xf32>
    %12 = vector.shape_cast %11 : vector<128x128xf32> to vector<8x16x128xf32>
    %c0_12 = arith.constant 0 : index
    %c0_13 = arith.constant 0 : index
    %c0_14 = arith.constant 0 : index
    %13 = vector.load %arg3[%c0_12, %c0_13, %c0_14] : memref<8x1x128xf32, #tpu.memory_space<vmem>>, vector<8x1x128xf32>
    %14 = vector.broadcast %13 : vector<8x1x128xf32> to vector<8x16x128xf32>
    %15 = arith.addf %12, %14 : vector<8x16x128xf32>
    %cst_15 = arith.constant 0.000000e+00 : f32
    %16 = vector.broadcast %cst_15 : f32 to vector<8x16x128xf32>
    %17 = arith.subf %16, %15 : vector<8x16x128xf32>
    %18 = math.exp %17 : vector<8x16x128xf32>
    %cst_16 = arith.constant 1.000000e+00 : f32
    %19 = vector.broadcast %cst_16 : f32 to vector<8x16x128xf32>
    %20 = arith.addf %19, %18 : vector<8x16x128xf32>
    %cst_17 = arith.constant 1.000000e+00 : f32
    %21 = vector.broadcast %cst_17 : f32 to vector<8x16x128xf32>
    %22 = arith.divf %21, %20 : vector<8x16x128xf32>
    %23 = arith.mulf %15, %22 : vector<8x16x128xf32>
    %24 = vector.shape_cast %23 : vector<8x16x128xf32> to vector<128x128xf32>
    %c0_18 = arith.constant 0 : index
    %c0_19 = arith.constant 0 : index
    %c0_20 = arith.constant 0 : index
    %25 = vector.load %arg7[%c0_18, %c0_19, %c0_20] : memref<1x128x128xf32, #tpu.memory_space<vmem>>, vector<1x128x128xf32>
    %26 = vector.shape_cast %25 : vector<1x128x128xf32> to vector<128x128xf32>
    %cst_21 = arith.constant dense<0.000000e+00> : vector<128x128xf32>
    %27 = tpu.matmul %24, %26, %cst_21 {dimension_numbers = #tpu.dot_dimension_numbers<[1], [0], [0], [1], [0, 0, 1, 1], [], []>} : vector<128x128xf32>, vector<128x128xf32>, vector<128x128xf32> -> vector<128x128xf32>
    %c0_22 = arith.constant 0 : index
    %c0_23 = arith.constant 0 : index
    %c0_24 = arith.constant 0 : index
    %28 = vector.load %arg8[%c0_22, %c0_23, %c0_24] : memref<1x1x128xf32, #tpu.memory_space<vmem>>, vector<1x1x128xf32>
    %29 = vector.shape_cast %28 : vector<1x1x128xf32> to vector<1x128xf32>
    %30 = vector.broadcast %29 : vector<1x128xf32> to vector<128x128xf32>
    %31 = arith.addf %27, %30 : vector<128x128xf32>
    %32 = vector.shape_cast %31 : vector<128x128xf32> to vector<8x16x128xf32>
    %c0_25 = arith.constant 0 : index
    %c0_26 = arith.constant 0 : index
    %c0_27 = arith.constant 0 : index
    %33 = vector.load %arg9[%c0_25, %c0_26, %c0_27] : memref<8x16x128xf32, #tpu.memory_space<vmem>>, vector<8x16x128xf32>
    tpu.vector_store %arg9[%c0_25, %c0_26, %c0_27], %32 {strides = array<i32>} : memref<8x16x128xf32, #tpu.memory_space<vmem>>, vector<8x16x128xf32>,
    return
  }
  func.func @transform_0(%arg0: i32, %arg1: memref<3xi32, #tpu.memory_space<smem>>) -> (i32, i32, i32) {
    %c0_i32 = arith.constant 0 : i32
    %c0_i32_0 = arith.constant 0 : i32
    %c0_i32_1 = arith.constant 0 : i32
    return %arg0, %c0_i32, %c0_i32_0 : i32, i32, i32
  }
  func.func @transform_1(%arg0: i32, %arg1: memref<3xi32, #tpu.memory_space<smem>>) -> (i32, i32, i32) {
    %c0_i32 = arith.constant 0 : i32
    %c0_i32_0 = arith.constant 0 : i32
    %c0_i32_1 = arith.constant 0 : i32
    return %arg0, %c0_i32, %c0_i32_0 : i32, i32, i32
  }
  func.func @transform_2(%arg0: i32, %arg1: memref<3xi32, #tpu.memory_space<smem>>) -> (i32, i32, i32) {
    %0 = arith.index_cast %arg0 : i32 to index
    %1 = memref.load %arg1[%0] : memref<3xi32, #tpu.memory_space<smem>>
    %c0_i32 = arith.constant 0 : i32
    %c0_i32_0 = arith.constant 0 : i32
    %c0_i32_1 = arith.constant 0 : i32
    return %1, %c0_i32, %c0_i32_0 : i32, i32, i32
  }
  func.func @transform_3(%arg0: i32, %arg1: memref<3xi32, #tpu.memory_space<smem>>) -> (i32, i32, i32) {
    %0 = arith.index_cast %arg0 : i32 to index
    %1 = memref.load %arg1[%0] : memref<3xi32, #tpu.memory_space<smem>>
    %c0_i32 = arith.constant 0 : i32
    %c0_i32_0 = arith.constant 0 : i32
    %c0_i32_1 = arith.constant 0 : i32
    return %1, %c0_i32, %c0_i32_0 : i32, i32, i32
  }
  func.func @transform_4(%arg0: i32, %arg1: memref<3xi32, #tpu.memory_space<smem>>) -> (i32, i32, i32) {
    %0 = arith.index_cast %arg0 : i32 to index
    %1 = memref.load %arg1[%0] : memref<3xi32, #tpu.memory_space<smem>>
    %c0_i32 = arith.constant 0 : i32
    %c0_i32_0 = arith.constant 0 : i32
    %c0_i32_1 = arith.constant 0 : i32
    return %1, %c0_i32, %c0_i32_0 : i32, i32, i32
  }
  func.func @transform_5(%arg0: i32, %arg1: memref<3xi32, #tpu.memory_space<smem>>) -> (i32, i32, i32) {
    %0 = arith.index_cast %arg0 : i32 to index
    %1 = memref.load %arg1[%0] : memref<3xi32, #tpu.memory_space<smem>>
    %c0_i32 = arith.constant 0 : i32
    %c0_i32_0 = arith.constant 0 : i32
    %c0_i32_1 = arith.constant 0 : i32
    return %1, %c0_i32, %c0_i32_0 : i32, i32, i32
  }
  func.func @transform_6(%arg0: i32, %arg1: memref<3xi32, #tpu.memory_space<smem>>) -> (i32, i32, i32) {
    %0 = arith.index_cast %arg0 : i32 to index
    %1 = memref.load %arg1[%0] : memref<3xi32, #tpu.memory_space<smem>>
    %c0_i32 = arith.constant 0 : i32
    %c0_i32_0 = arith.constant 0 : i32
    %c0_i32_1 = arith.constant 0 : i32
    return %1, %c0_i32, %c0_i32_0 : i32, i32, i32
  }
  func.func @transform_7(%arg0: i32, %arg1: memref<3xi32, #tpu.memory_space<smem>>) -> (i32, i32, i32) {
    %c0_i32 = arith.constant 0 : i32
    %c0_i32_0 = arith.constant 0 : i32
    %c0_i32_1 = arith.constant 0 : i32
    return %arg0, %c0_i32, %c0_i32_0 : i32, i32, i32
  }
}

</mosaic_0001>

<llo_original>
// kernel: tpu_custom_call.1
$region0: #{tpu_custom_call.1}
  #allocation0 [shape = 'u32[]', space=smem, size = 0x4, offset = 0x4, fixed_abs, tag = 'smem constant byte address 0x4 - core index']
  #allocation1 [shape = 'u32[144,128]{1,0:T(1,128)}', space=vmem, size = 0x12000, scoped, tag = 'internal scratch']
  #allocation2 [shape = 's32[1]{0}', space=sflag, size = 0x4, scoped, tag = 'scoped memory for tpu_custom_call.1']
  #allocation3 [shape = 'u8[512]{0}', space=smem, size = 0x200, scoped, tag = 'prefetched SMEM operand 0']
  %s0 = inlined_call_operand.hbm [shape: s32[3], index: 0, kind: input, shape index: {}]
  %s1 = inlined_call_operand.hbm [shape: f32[24,16,32], index: 1, kind: input, shape index: {}]
  %s2 = inlined_call_operand.hbm [shape: f32[24,1,128], index: 2, kind: input, shape index: {}]
  %s3 = inlined_call_operand.hbm [shape: f32[3,32,128], index: 3, kind: input, shape index: {}]
  %s4 = inlined_call_operand.vmem [shape: f32[3,1,128], index: 4, kind: input, shape index: {}]
  %s5 = inlined_call_operand.hbm [shape: f32[3,128,128], index: 5, kind: input, shape index: {}]
  %s6 = inlined_call_operand.hbm [shape: f32[3,128,128], index: 6, kind: input, shape index: {}]
  %s7 = inlined_call_operand.vmem [shape: f32[3,1,128], index: 7, kind: input, shape index: {}]
  %s8 = inlined_call_operand.hbm [shape: f32[24,16,128], index: 8, kind: output, shape index: {}]
  %s9 = sld [smem:[#allocation0]]
  $region81: #{tpu_custom_call.1} parent=0
    _
  %s11 = ssub.s32 1, %s9
  %s12 = scalar_select 0, %s11, %s9
  %14 = dma.hbm_to_smem %s0, 16, [#allocation3], [#allocation2]
  %15 = dma.done [#allocation2], 16
  %16 = sfence
  $region1: #{tpu_custom_call.1} parent=0
    #allocation4 [shape = 'u8[131072]{0}', space=vmem, size = 0x20000, scoped, tag = 'input window, operand 1']
    #allocation5 [shape = 's32[2]{0}', space=sflag, size = 0x8, scoped, tag = 'scoped memory for tpu_custom_call.1']
    #allocation6 [shape = 's32[2]{0}', space=sflag, size = 0x8, scoped, tag = 'scoped memory for tpu_custom_call.1']
    #allocation7 [shape = 'u8[8192]{0}', space=vmem, size = 0x2000, scoped, tag = 'input window, operand 2']
    #allocation8 [shape = 's32[2]{0}', space=sflag, size = 0x8, scoped, tag = 'scoped memory for tpu_custom_call.1']
    #allocation9 [shape = 'u8[32768]{0}', space=vmem, size = 0x8000, scoped, tag = 'input window, operand 3']
    #allocation10 [shape = 'u8[131072]{0}', space=vmem, size = 0x20000, scoped, tag = 'input window, operand 5']
    #allocation11 [shape = 's32[2]{0}', space=sflag, size = 0x8, scoped, tag = 'scoped memory for tpu_custom_call.1']
    #allocation12 [shape = 'u8[131072]{0}', space=vmem, size = 0x20000, scoped, tag = 'input window, operand 6']
    #allocation13 [shape = 'u8[131072]{0}', space=vmem, size = 0x20000, scoped, tag = 'output window, operand 0']
    %17 = vsyncpa [#allocation5], 0
    %s18 = scalar_lea.sflag [#allocation5], 1
    %19 = vsyncpa %s18, 0
    %20 = vsyncpa [#allocation8], 0
    %s21 = scalar_lea.sflag [#allocation8], 1
    %22 = vsyncpa %s21, 0
    %23 = vsyncpa [#allocation11], 0
    %s24 = scalar_lea.sflag [#allocation11], 1
    %25 = vsyncpa %s24, 0
    %26 = vsyncpa [#allocation6], 0
    %s27 = scalar_lea.sflag [#allocation6], 1
    %28 = vsyncpa %s27, 0
    loop: start=0, step=1, limit=5
    $region2: #{tpu_custom_call.1} parent=1 // loop_pre_header
      _
    $region3: #{tpu_custom_call.1} parent=1 // loop_header
      %s30 = sphi 0, %s34
      %p31 = scmp.ge.s32.totalorder %s30, 5
      %s40 = sphi 0, %s42
      %s43 = sphi 0, %s40
      %s44 = sphi 0, %s43
      %s60 = sphi 0, %s44
      %s66 = sphi 0, %s68
      %s69 = sphi 0, %s66
      %s70 = sphi 0, %s69
      %s86 = sphi 0, %s70
      %s94 = sphi 0, %s96
      %s97 = sphi 0, %s94
      %s98 = sphi 0, %s97
      %s114 = sphi 0, %s98
      %s122 = sphi 0, %s124
      %s125 = sphi 0, %s122
      %s126 = sphi 0, %s125
      %s142 = sphi 0, %s126
      %s150 = sphi 0, %s152
      %s153 = sphi 0, %s150
      %s154 = sphi 0, %s153
      %s170 = sphi 0, %s154
      %s178 = sphi 0, %s180
      %s181 = sphi 0, %s178
      %s182 = sphi 0, %s181
      %s198 = sphi 0, %s182
      %s206 = sphi 0, %s208
      %s209 = sphi 0, %s206
      %s210 = sphi 0, %s209
      %s226 = sphi 0, %s210
      %s232 = sphi 0, %s234
      %s235 = sphi 0, %s232
      %s236 = sphi 0, %s235
      %s252 = sphi 0, %s236
    $region4: #{tpu_custom_call.1} parent=1 // loop_header_branch
      %33 = sbr.rel (%p31) target = $region8
    $region5: #{tpu_custom_call.1} parent=1 // loop_body
      %s35 = ssub.s32 %s30, 1
      %s36 = ssub.s32 %s30, 2
      %s37 = sadd.s32 %s30, 1
      %s38 = ssub.s32 %s30, %s37
      %p39 = scmp.eq.s32.totalorder %s38, 0
      %s41 = sadd.s32 %s40, 1
      %s42 = scalar_select %p39, %s40, %s41
      %p45 = pneg %p39
      %p46 = scmp.eq.s32.totalorder %s30, 2
      %p47 = por %p45, %p46
      %p48 = scmp.ne.s32.totalorder %s40, %s43
      %p49 = scmp.eq.s32.totalorder %s30, 0
      %p50 = por %p48, %p49
      %p51 = scmp.ne.s32.totalorder %s40, %s43
      %p52 = scmp.eq.s32.totalorder %s35, 2
      %p53 = por %p51, %p52
      %p54 = scmp.ne.s32.totalorder %s43, %s44
      %p55 = scmp.eq.s32.totalorder %s35, 0
      %p56 = por %p54, %p55
      %p57 = scmp.ne.s32.totalorder %s43, %s44
      %p58 = scmp.eq.s32.totalorder %s36, 2
      %p59 = por %p57, %p58
      %p61 = scmp.ne.s32.totalorder %s44, %s60
      %p62 = scmp.eq.s32.totalorder %s36, 0
      %p63 = por %p61, %p62
      %s64 = ssub.s32 %s30, %s37
      %p65 = scmp.eq.s32.totalorder %s64, 0
      %s67 = sadd.s32 %s66, 1
      %s68 = scalar_select %p65, %s66, %s67
      %p71 = pneg %p65
      %p72 = scmp.eq.s32.totalorder %s30, 2
      %p73 = por %p71, %p72
      %p74 = scmp.ne.s32.totalorder %s66, %s69
      %p75 = scmp.eq.s32.totalorder %s30, 0
      %p76 = por %p74, %p75
      %p77 = scmp.ne.s32.totalorder %s66, %s69
      %p78 = scmp.eq.s32.totalorder %s35, 2
      %p79 = por %p77, %p78
      %p80 = scmp.ne.s32.totalorder %s69, %s70
      %p81 = scmp.eq.s32.totalorder %s35, 0
      %p82 = por %p80, %p81
      %p83 = scmp.ne.s32.totalorder %s69, %s70
      %p84 = scmp.eq.s32.totalorder %s36, 2
      %p85 = por %p83, %p84
      %p87 = scmp.ne.s32.totalorder %s70, %s86
      %p88 = scmp.eq.s32.totalorder %s36, 0
      %p89 = por %p87, %p88
      %s90 = sld [smem:[#allocation3 + %s30]]
      %s91 = sld [smem:[#allocation3 + %s37]]
      %s92 = ssub.s32 %s90, %s91
      %p93 = scmp.eq.s32.totalorder %s92, 0
      %s95 = sadd.s32 %s94, 1
      %s96 = scalar_select %p93, %s94, %s95
      %p99 = pneg %p93
      %p100 = scmp.eq.s32.totalorder %s30, 2
      %p101 = por %p99, %p100
      %p102 = scmp.ne.s32.totalorder %s94, %s97
      %p103 = scmp.eq.s32.totalorder %s30, 0
      %p104 = por %p102, %p103
      %p105 = scmp.ne.s32.totalorder %s94, %s97
      %p106 = scmp.eq.s32.totalorder %s35, 2
      %p107 = por %p105, %p106
      %p108 = scmp.ne.s32.totalorder %s97, %s98
      %p109 = scmp.eq.s32.totalorder %s35, 0
      %p110 = por %p108, %p109
      %p111 = scmp.ne.s32.totalorder %s97, %s98
      %p112 = scmp.eq.s32.totalorder %s36, 2
      %p113 = por %p111, %p112
      %p115 = scmp.ne.s32.totalorder %s98, %s114
      %p116 = scmp.eq.s32.totalorder %s36, 0
      %p117 = por %p115, %p116
      %s118 = sld [smem:[#allocation3 + %s30]]
      %s119 = sld [smem:[#allocation3 + %s37]]
      %s120 = ssub.s32 %s118, %s119
      %p121 = scmp.eq.s32.totalorder %s120, 0
      %s123 = sadd.s32 %s122, 1
      %s124 = scalar_select %p121, %s122, %s123
      %p127 = pneg %p121
      %p128 = scmp.eq.s32.totalorder %s30, 2
      %p129 = por %p127, %p128
      %p130 = scmp.ne.s32.totalorder %s122, %s125
      %p131 = scmp.eq.s32.totalorder %s30, 0
      %p132 = por %p130, %p131
      %p133 = scmp.ne.s32.totalorder %s122, %s125
      %p134 = scmp.eq.s32.totalorder %s35, 2
      %p135 = por %p133, %p134
      %p136 = scmp.ne.s32.totalorder %s125, %s126
      %p137 = scmp.eq.s32.totalorder %s35, 0
      %p138 = por %p136, %p137
      %p139 = scmp.ne.s32.totalorder %s125, %s126
      %p140 = scmp.eq.s32.totalorder %s36, 2
      %p141 = por %p139, %p140
      %p143 = scmp.ne.s32.totalorder %s126, %s142
      %p144 = scmp.eq.s32.totalorder %s36, 0
      %p145 = por %p143, %p144
      %s146 = sld [smem:[#allocation3 + %s30]]
      %s147 = sld [smem:[#allocation3 + %s37]]
      %s148 = ssub.s32 %s146, %s147
      %p149 = scmp.eq.s32.totalorder %s148, 0
      %s151 = sadd.s32 %s150, 1
      %s152 = scalar_select %p149, %s150, %s151
      %p155 = pneg %p149
      %p156 = scmp.eq.s32.totalorder %s30, 2
      %p157 = por %p155, %p156
      %p158 = scmp.ne.s32.totalorder %s150, %s153
      %p159 = scmp.eq.s32.totalorder %s30, 0
      %p160 = por %p158, %p159
      %p161 = scmp.ne.s32.totalorder %s150, %s153
      %p162 = scmp.eq.s32.totalorder %s35, 2
      %p163 = por %p161, %p162
      %p164 = scmp.ne.s32.totalorder %s153, %s154
      %p165 = scmp.eq.s32.totalorder %s35, 0
      %p166 = por %p164, %p165
      %p167 = scmp.ne.s32.totalorder %s153, %s154
      %p168 = scmp.eq.s32.totalorder %s36, 2
      %p169 = por %p167, %p168
      %p171 = scmp.ne.s32.totalorder %s154, %s170
      %p172 = scmp.eq.s32.totalorder %s36, 0
      %p173 = por %p171, %p172
      %s174 = sld [smem:[#allocation3 + %s30]]
      %s175 = sld [smem:[#allocation3 + %s37]]
      %s176 = ssub.s32 %s174, %s175
      %p177 = scmp.eq.s32.totalorder %s176, 0
      %s179 = sadd.s32 %s178, 1
      %s180 = scalar_select %p177, %s178, %s179
      %p183 = pneg %p177
      %p184 = scmp.eq.s32.totalorder %s30, 2
      %p185 = por %p183, %p184
      %p186 = scmp.ne.s32.totalorder %s178, %s181
      %p187 = scmp.eq.s32.totalorder %s30, 0
      %p188 = por %p186, %p187
      %p189 = scmp.ne.s32.totalorder %s178, %s181
      %p190 = scmp.eq.s32.totalorder %s35, 2
      %p191 = por %p189, %p190
      %p192 = scmp.ne.s32.totalorder %s181, %s182
      %p193 = scmp.eq.s32.totalorder %s35, 0
      %p194 = por %p192, %p193
      %p195 = scmp.ne.s32.totalorder %s181, %s182
      %p196 = scmp.eq.s32.totalorder %s36, 2
      %p197 = por %p195, %p196
      %p199 = scmp.ne.s32.totalorder %s182, %s198
      %p200 = scmp.eq.s32.totalorder %s36, 0
      %p201 = por %p199, %p200
      %s202 = sld [smem:[#allocation3 + %s30]]
      %s203 = sld [smem:[#allocation3 + %s37]]
      %s204 = ssub.s32 %s202, %s203
      %p205 = scmp.eq.s32.totalorder %s204, 0
      %s207 = sadd.s32 %s206, 1
      %s208 = scalar_select %p205, %s206, %s207
      %p211 = pneg %p205
      %p212 = scmp.eq.s32.totalorder %s30, 2
      %p213 = por %p211, %p212
      %p214 = scmp.ne.s32.totalorder %s206, %s209
      %p215 = scmp.eq.s32.totalorder %s30, 0
      %p216 = por %p214, %p215
      %p217 = scmp.ne.s32.totalorder %s206, %s209
      %p218 = scmp.eq.s32.totalorder %s35, 2
      %p219 = por %p217, %p218
      %p220 = scmp.ne.s32.totalorder %s209, %s210
      %p221 = scmp.eq.s32.totalorder %s35, 0
      %p222 = por %p220, %p221
      %p223 = scmp.ne.s32.totalorder %s209, %s210
      %p224 = scmp.eq.s32.totalorder %s36, 2
      %p225 = por %p223, %p224
      %p227 = scmp.ne.s32.totalorder %s210, %s226
      %p228 = scmp.eq.s32.totalorder %s36, 0
      %p229 = por %p227, %p228
      %s230 = ssub.s32 %s30, %s37
      %p231 = scmp.eq.s32.totalorder %s230, 0
      %s233 = sadd.s32 %s232, 1
      %s234 = scalar_select %p231, %s232, %s233
      %p237 = pneg %p231
      %p238 = scmp.eq.s32.totalorder %s30, 2
      %p239 = por %p237, %p238
      %p240 = scmp.ne.s32.totalorder %s232, %s235
      %p241 = scmp.eq.s32.totalorder %s30, 0
      %p242 = por %p240, %p241
      %p243 = scmp.ne.s32.totalorder %s232, %s235
      %p244 = scmp.eq.s32.totalorder %s35, 2
      %p245 = por %p243, %p244
      %p246 = scmp.ne.s32.totalorder %s235, %s236
      %p247 = scmp.eq.s32.totalorder %s35, 0
      %p248 = por %p246, %p247
      %p249 = scmp.ne.s32.totalorder %s235, %s236
      %p250 = scmp.eq.s32.totalorder %s36, 2
      %p251 = por %p249, %p250
      %p253 = scmp.ne.s32.totalorder %s236, %s252
      %p254 = scmp.eq.s32.totalorder %s36, 0
      %p255 = por %p253, %p254
      %p256 = scmp.le.s32.totalorder 1, %s30
      %p257 = scmp.lt.s32.totalorder %s30, 4
      %p258 = pnand %p256, %p257
      %p259 = pneg %p258
      // Predicated region
      $region9: #{tpu_custom_call.1} parent=5 // pred_check
        _
      $region10: #{tpu_custom_call.1} parent=5 // pred_check_branch
        %261 = sbr.rel (%p258) target = $region12
      $region11: #{tpu_custom_call.1} parent=5 // pred_region
        %s262 = ssub.s32 %s30, 1
      $region12: #{tpu_custom_call.1} parent=5 // pred_fallthru
        _
      %p263 = scmp.lt.s32.totalorder %s30, 3
      // Predicated region
      $region13: #{tpu_custom_call.1} parent=5 // pred_check
        %p264 = pneg %p263
      $region14: #{tpu_custom_call.1} parent=5 // pred_check_branch
        %266 = sbr.rel (%p264) target = $region16
      $region15: #{tpu_custom_call.1} parent=5 // pred_region
        // Predicated region
        $region17: #{tpu_custom_call.1} parent=15 // pred_check
          %p267 = pneg %p50
        $region18: #{tpu_custom_call.1} parent=15 // pred_check_branch
          %269 = sbr.rel (%p267) target = $region20
        $region19: #{tpu_custom_call.1} parent=15 // pred_region
          %s270 = sand.u32 %s40, 1
          %s271 = scalar_lea.sflag [#allocation5], %s270
          %s272 = sand.u32 %s40, 1
          %s273 = smul.addr %s272, 128
          %s274 = scalar_lea.vmem [#allocation4], %s273
          %s275 = smul.u32 8, %s30
          %s277 = ssub.s32 2048, 2048
          %278 = vsyncadd %s271, %s277
          %s279 = smul.addr %s275, 2
          %s280 = smul.addr %s279, 128
          %s281 = scalar_lea.hbm %s1, %s280
          %s282 = sshll.u32 %s274, 4
          %s283 = int_to_ptr.vmem [resolvable:$true] %s282
          %288 = dma.hbm_to_vmem [thread:$0]  %s281, 2048, %s283, %s271, 128, 128, 8
        $region20: #{tpu_custom_call.1} parent=15 // pred_fallthru
          _
        // Predicated region
        $region21: #{tpu_custom_call.1} parent=15 // pred_check
          %p289 = pneg %p76
        $region22: #{tpu_custom_call.1} parent=15 // pred_check_branch
          %291 = sbr.rel (%p289) target = $region24
        $region23: #{tpu_custom_call.1} parent=15 // pred_region
          %s292 = sand.u32 %s30, 1
          %s293 = scalar_lea.sflag [#allocation8], %s292
          %s294 = sand.u32 %s66, 1
          %s295 = smul.addr %s294, 8
          %s296 = scalar_lea.vmem [#allocation7], %s295
          %s297 = smul.u32 8, %s30
          %s299 = ssub.s32 128, 128
          %300 = vsyncadd %s293, %s299
          %s301 = smul.addr %s297, 16
          %s302 = scalar_lea.hbm %s2, %s301
          %s303 = sshll.u32 %s296, 4
          %s304 = int_to_ptr.vmem [resolvable:$true] %s303
          %309 = dma.hbm_to_vmem [thread:$0]  %s302, 128, %s304, %s293, 16, 16, 1
        $region24: #{tpu_custom_call.1} parent=15 // pred_fallthru
          _
        // Predicated region
        $region25: #{tpu_custom_call.1} parent=15 // pred_check
          %p310 = pneg %p104
        $region26: #{tpu_custom_call.1} parent=15 // pred_check_branch
          %312 = sbr.rel (%p310) target = $region28
        $region27: #{tpu_custom_call.1} parent=15 // pred_region
          %s313 = sand.u32 %s30, 1
          %s314 = scalar_lea.sflag [#allocation8], %s313
          %s315 = sand.u32 %s94, 1
          %s316 = smul.addr %s315, 32
          %s317 = scalar_lea.vmem [#allocation9], %s316
          %s318 = sld [smem:[#allocation3 + %s30]]
          %s320 = ssub.s32 512, 512
          %321 = vsyncadd %s314, %s320
          %s322 = smul.addr %s318, 4
          %s323 = smul.addr %s322, 128
          %s324 = scalar_lea.hbm %s3, %s323
          %s325 = sshll.u32 %s317, 4
          %s326 = int_to_ptr.vmem [resolvable:$true] %s325
          %331 = dma.hbm_to_vmem [thread:$0]  %s324, 512, %s326, %s314, 128, 128, 8
        $region28: #{tpu_custom_call.1} parent=15 // pred_fallthru
          _
        // Predicated region
        $region29: #{tpu_custom_call.1} parent=15 // pred_check
          %p332 = pneg %p132
        $region30: #{tpu_custom_call.1} parent=15 // pred_check_branch
          %334 = sbr.rel (%p332) target = $region32
        $region31: #{tpu_custom_call.1} parent=15 // pred_region
          %s335 = sld [smem:[#allocation3 + %s30]]
          %p336 = scmp.lt.s32.totalorder %s335, 2
          %s337 = scalar_select %p336, %s335, 2
          %s338 = scalar_lea.vmem %s4, %s337
          %s339 = sld [smem:[#allocation3 + %s30]]
        $region32: #{tpu_custom_call.1} parent=15 // pred_fallthru
          _
        // Predicated region
        $region33: #{tpu_custom_call.1} parent=15 // pred_check
          %p340 = pneg %p160
        $region34: #{tpu_custom_call.1} parent=15 // pred_check_branch
          %342 = sbr.rel (%p340) target = $region36
        $region35: #{tpu_custom_call.1} parent=15 // pred_region
          %s343 = sand.u32 %s30, 1
          %s344 = scalar_lea.sflag [#allocation11], %s343
          %s345 = sand.u32 %s150, 1
          %s346 = smul.addr %s345, 128
          %s347 = scalar_lea.vmem [#allocation10], %s346
          %s348 = sld [smem:[#allocation3 + %s30]]
          %s350 = ssub.s32 2048, 2048
          %351 = vsyncadd %s344, %s350
          %s352 = smul.addr %s348, 16
          %s353 = smul.addr %s352, 128
          %s354 = scalar_lea.hbm %s5, %s353
          %s355 = sshll.u32 %s347, 4
          %s356 = int_to_ptr.vmem [resolvable:$true] %s355
          %361 = dma.hbm_to_vmem [thread:$0]  %s354, 2048, %s356, %s344, 128, 128, 8
        $region36: #{tpu_custom_call.1} parent=15 // pred_fallthru
          _
        // Predicated region
        $region37: #{tpu_custom_call.1} parent=15 // pred_check
          %p362 = pneg %p188
        $region38: #{tpu_custom_call.1} parent=15 // pred_check_branch
          %364 = sbr.rel (%p362) target = $region40
        $region39: #{tpu_custom_call.1} parent=15 // pred_region
          %s365 = sand.u32 %s30, 1
          %s366 = scalar_lea.sflag [#allocation11], %s365
          %s367 = sand.u32 %s178, 1
          %s368 = smul.addr %s367, 128
          %s369 = scalar_lea.vmem [#allocation12], %s368
          %s370 = sld [smem:[#allocation3 + %s30]]
          %s372 = ssub.s32 2048, 2048
          %373 = vsyncadd %s366, %s372
          %s374 = smul.addr %s370, 16
          %s375 = smul.addr %s374, 128
          %s376 = scalar_lea.hbm %s6, %s375
          %s377 = sshll.u32 %s369, 4
          %s378 = int_to_ptr.vmem [resolvable:$true] %s377
          %383 = dma.hbm_to_vmem [thread:$0]  %s376, 2048, %s378, %s366, 128, 128, 8
        $region40: #{tpu_custom_call.1} parent=15 // pred_fallthru
          _
        // Predicated region
        $region41: #{tpu_custom_call.1} parent=15 // pred_check
          %p384 = pneg %p216
        $region42: #{tpu_custom_call.1} parent=15 // pred_check_branch
          %386 = sbr.rel (%p384) target = $region44
        $region43: #{tpu_custom_call.1} parent=15 // pred_region
          %s387 = sld [smem:[#allocation3 + %s30]]
          %p388 = scmp.lt.s32.totalorder %s387, 2
          %s389 = scalar_select %p388, %s387, 2
          %s390 = scalar_lea.vmem %s7, %s389
          %s391 = sld [smem:[#allocation3 + %s30]]
        $region44: #{tpu_custom_call.1} parent=15 // pred_fallthru
          _
      $region16: #{tpu_custom_call.1} parent=5 // pred_fallthru
        _
      %p392 = scmp.le.s32.totalorder 1, %s30
      %p393 = scmp.lt.s32.totalorder %s30, 4
      %p394 = pnand %p392, %p393
      %p395 = pneg %p394
      // Predicated region
      $region45: #{tpu_custom_call.1} parent=5 // pred_check
        _
      $region46: #{tpu_custom_call.1} parent=5 // pred_check_branch
        %397 = sbr.rel (%p394) target = $region48
      $region47: #{tpu_custom_call.1} parent=5 // pred_region
        %s398 = ssub.s32 %s30, 1
        %s399 = sand.u32 %s43, 1
        %s400 = scalar_lea.sflag [#allocation5], %s399
        %s401 = sand.u32 %s43, 1
        %s402 = smul.addr %s401, 128
        %s403 = scalar_lea.vmem [#allocation4], %s402
        // Predicated region
        $region49: #{tpu_custom_call.1} parent=47 // pred_check
          %p404 = pneg %p56
        $region50: #{tpu_custom_call.1} parent=47 // pred_check_branch
          %406 = sbr.rel (%p404) target = $region52
        $region51: #{tpu_custom_call.1} parent=47 // pred_region
          %407 = dma.done %s400, 2048
        $region52: #{tpu_custom_call.1} parent=47 // pred_fallthru
          _
        %s408 = sand.u32 %s35, 1
        %s409 = scalar_lea.sflag [#allocation8], %s408
        %s410 = sand.u32 %s69, 1
        %s411 = smul.addr %s410, 8
        %s412 = scalar_lea.vmem [#allocation7], %s411
        // Predicated region
        $region53: #{tpu_custom_call.1} parent=47 // pred_check
          %p413 = pneg %p82
        $region54: #{tpu_custom_call.1} parent=47 // pred_check_branch
          %415 = sbr.rel (%p413) target = $region56
        $region55: #{tpu_custom_call.1} parent=47 // pred_region
          %416 = dma.done %s409, 128
        $region56: #{tpu_custom_call.1} parent=47 // pred_fallthru
          _
        %s417 = sand.u32 %s35, 1
        %s418 = scalar_lea.sflag [#allocation8], %s417
        %s419 = sand.u32 %s97, 1
        %s420 = smul.addr %s419, 32
        %s421 = scalar_lea.vmem [#allocation9], %s420
        // Predicated region
        $region57: #{tpu_custom_call.1} parent=47 // pred_check
          %p422 = pneg %p110
        $region58: #{tpu_custom_call.1} parent=47 // pred_check_branch
          %424 = sbr.rel (%p422) target = $region60
        $region59: #{tpu_custom_call.1} parent=47 // pred_region
          %425 = dma.done %s418, 512
        $region60: #{tpu_custom_call.1} parent=47 // pred_fallthru
          _
        %s426 = sand.u32 %s35, 1
        %s427 = scalar_lea.sflag [#allocation11], %s426
        %s428 = sand.u32 %s153, 1
        %s429 = smul.addr %s428, 128
        %s430 = scalar_lea.vmem [#allocation10], %s429
        // Predicated region
        $region61: #{tpu_custom_call.1} parent=47 // pred_check
          %p431 = pneg %p166
        $region62: #{tpu_custom_call.1} parent=47 // pred_check_branch
          %433 = sbr.rel (%p431) target = $region64
        $region63: #{tpu_custom_call.1} parent=47 // pred_region
          %434 = dma.done %s427, 2048
        $region64: #{tpu_custom_call.1} parent=47 // pred_fallthru
          _
        %s435 = sand.u32 %s35, 1
        %s436 = scalar_lea.sflag [#allocation11], %s435
        %s437 = sand.u32 %s181, 1
        %s438 = smul.addr %s437, 128
        %s439 = scalar_lea.vmem [#allocation12], %s438
        // Predicated region
        $region65: #{tpu_custom_call.1} parent=47 // pred_check
          %p440 = pneg %p194
        $region66: #{tpu_custom_call.1} parent=47 // pred_check_branch
          %442 = sbr.rel (%p440) target = $region68
        $region67: #{tpu_custom_call.1} parent=47 // pred_region
          %443 = dma.done %s436, 2048
        $region68: #{tpu_custom_call.1} parent=47 // pred_fallthru
          _
        %s444 = sand.u32 %s43, 1
        %s445 = scalar_lea.sflag [#allocation5], %s444
        %s446 = sand.u32 %s43, 1
        %s447 = smul.addr %s446, 128
        %s448 = scalar_lea.vmem [#allocation4], %s447
        %p449 = pneg %p56
        %p450 = pneg %p53
        %s451 = sand.u32 %s35, 1
        %s452 = scalar_lea.sflag [#allocation8], %s451
        %s453 = sand.u32 %s69, 1
        %s454 = smul.addr %s453, 8
        %s455 = scalar_lea.vmem [#allocation7], %s454
        %p456 = pneg %p82
        %p457 = pneg %p79
        %s458 = sand.u32 %s35, 1
        %s459 = scalar_lea.sflag [#allocation8], %s458
        %s460 = sand.u32 %s97, 1
        %s461 = smul.addr %s460, 32
        %s462 = scalar_lea.vmem [#allocation9], %s461
        %p463 = pneg %p110
        %p464 = pneg %p107
        %s465 = sld [smem:[#allocation3 + %s35]]
        %p466 = scmp.lt.s32.totalorder %s465, 2
        %s467 = scalar_select %p466, %s465, 2
        %s468 = scalar_lea.vmem %s4, %s467
        %p469 = pneg %p138
        %p470 = pneg %p135
        %s471 = sand.u32 %s35, 1
        %s472 = scalar_lea.sflag [#allocation11], %s471
        %s473 = sand.u32 %s153, 1
        %s474 = smul.addr %s473, 128
        %s475 = scalar_lea.vmem [#allocation10], %s474
        %p476 = pneg %p166
        %p477 = pneg %p163
        %s478 = sand.u32 %s35, 1
        %s479 = scalar_lea.sflag [#allocation11], %s478
        %s480 = sand.u32 %s181, 1
        %s481 = smul.addr %s480, 128
        %s482 = scalar_lea.vmem [#allocation12], %s481
        %p483 = pneg %p194
        %p484 = pneg %p191
        %s485 = sld [smem:[#allocation3 + %s35]]
        %p486 = scmp.lt.s32.totalorder %s485, 2
        %s487 = scalar_select %p486, %s485, 2
        %s488 = scalar_lea.vmem %s7, %s487
        %p489 = pneg %p222
        %p490 = pneg %p219
        %p491 = pneg %p248
        %p492 = pneg %p245
        %s493 = sand.u32 %s235, 1
        %s494 = scalar_lea.sflag [#allocation6], %s493
        %s495 = sand.u32 %s235, 1
        %s496 = smul.addr %s495, 128
        %s497 = scalar_lea.vmem [#allocation13], %s496
        %s498 = smul.u32 8, %s35
        %s499 = smul.u32 8, %s35
        %s500 = sld [smem:[#allocation3 + %s35]]
        %s501 = sld [smem:[#allocation3 + %s35]]
        %p502 = scmp.lt.s32.totalorder %s501, 2
        %s503 = scalar_select %p502, %s501, 2
        %s504 = scalar_lea.vmem %s4, %s503
        %s505 = sld [smem:[#allocation3 + %s35]]
        %s506 = sld [smem:[#allocation3 + %s35]]
        %s507 = sld [smem:[#allocation3 + %s35]]
        %s508 = sld [smem:[#allocation3 + %s35]]
        %p509 = scmp.lt.s32.totalorder %s508, 2
        %s510 = scalar_select %p509, %s508, 2
        %s511 = scalar_lea.vmem %s7, %s510
        %s512 = sld [smem:[#allocation3 + %s35]]
        %s513 = smul.u32 8, %s35
        %v514 = vld [vmem:[%s403] sm:$0xff]
        %v515 = vld [vmem:[%s403 + $0x8] sm:$0xff]
        %v516 = vld [vmem:[%s403 + $0x10] sm:$0xff]
        %v517 = vld [vmem:[%s403 + $0x18] sm:$0xff]
        %v518 = vld [vmem:[%s403 + $0x20] sm:$0xff]
        %v519 = vld [vmem:[%s403 + $0x28] sm:$0xff]
        %v520 = vld [vmem:[%s403 + $0x30] sm:$0xff]
        %v521 = vld [vmem:[%s403 + $0x38] sm:$0xff]
        %v522 = vld [vmem:[%s403 + $0x40] sm:$0xff]
        %v523 = vld [vmem:[%s403 + $0x48] sm:$0xff]
        %v524 = vld [vmem:[%s403 + $0x50] sm:$0xff]
        %v525 = vld [vmem:[%s403 + $0x58] sm:$0xff]
        %v526 = vld [vmem:[%s403 + $0x60] sm:$0xff]
        %v527 = vld [vmem:[%s403 + $0x68] sm:$0xff]
        %v528 = vld [vmem:[%s403 + $0x70] sm:$0xff]
        %v529 = vld [vmem:[%s403 + $0x78] sm:$0xff]
        %v530 = vld [vmem:[%s421] sm:$0xff]
        %v531 = vld [vmem:[%s421 + $0x8] sm:$0xff]
        %v532 = vld [vmem:[%s421 + $0x10] sm:$0xff]
        %v533 = vld [vmem:[%s421 + $0x18] sm:$0xff]
        %v534 = vld [vmem:[%s504] sm:$0x1]
        %v536 = vlaneseq
        %v537 = vshrl.u32 %v536, 7
        %v538 = vsub.s32 0, %v537
        %v539 = vrot.slane %v534, %v538
        %vm541 = vcmask 261120
        %v543 = vsel %vm541, %v514, 0
        %v546 = vsel %vm541, %v515, 0
        %v549 = vsel %vm541, %v516, 0
        %v552 = vsel %vm541, %v517, 0
        %v555 = vsel %vm541, %v518, 0
        %v558 = vsel %vm541, %v519, 0
        %v561 = vsel %vm541, %v520, 0
        %v564 = vsel %vm541, %v521, 0
        %v567 = vsel %vm541, %v522, 0
        %v570 = vsel %vm541, %v523, 0
        %v573 = vsel %vm541, %v524, 0
        %v576 = vsel %vm541, %v525, 0
        %v579 = vsel %vm541, %v526, 0
        %v582 = vsel %vm541, %v527, 0
        %v585 = vsel %vm541, %v528, 0
        %v588 = vsel %vm541, %v529, 0
        %590 = vmatprep.subr.mxu0 0.0
        %591 = vmatpush1.msra.mxu0 %v530
        %592 = vmatprep.subr.mxu0 0.0
        %593 = vmatpush1.msra.mxu0 %v531
        %594 = vmatprep.subr.mxu0 0.0
        %595 = vmatpush1.msra.mxu0 %v532
        %596 = vmatprep.subr.mxu0 0.0
        %597 = vmatpush1.msra.mxu0 %v533
        %598 = vmatprep.subr.mxu0 0.0
        %599 = vmatpush1.msra.mxu0 0.0
        %600 = vmatprep.subr.mxu0 0.0
        %601 = vmatpush1.msra.mxu0 0.0
        %602 = vmatprep.subr.mxu0 0.0
        %603 = vmatpush1.msra.mxu0 0.0
        %604 = vmatprep.subr.mxu0 0.0
        %605 = vmatpush1.msra.mxu0 0.0
        %606 = vmatprep.subr.mxu0 0.0
        %607 = vmatpush1.msra.mxu0 0.0
        %608 = vmatprep.subr.mxu0 0.0
        %609 = vmatpush1.msra.mxu0 0.0
        %610 = vmatprep.subr.mxu0 0.0
        %611 = vmatpush1.msra.mxu0 0.0
        %612 = vmatprep.subr.mxu0 0.0
        %613 = vmatpush1.msra.mxu0 0.0
        %614 = vmatprep.subr.mxu0 0.0
        %615 = vmatpush1.msra.mxu0 0.0
        %616 = vmatprep.subr.mxu0 0.0
        %617 = vmatpush1.msra.mxu0 0.0
        %618 = vmatprep.subr.mxu0 0.0
        %619 = vmatpush1.msra.mxu0 0.0
        %620 = vmatprep.subr.mxu0 0.0
        %621 = vmatpush1.msra.mxu0 0.0
        %622 = vmatprep.subr.mxu0 0.0
        %623 = vmatpush1.msra.mxu0 0.0
        %624 = vmatprep.subr.mxu0 0.0
        %625 = vmatpush1.msra.mxu0 0.0
        %626 = vmatprep.subr.mxu0 0.0
        %627 = vmatpush1.msra.mxu0 0.0
        %628 = vmatprep.subr.mxu0 0.0
        %629 = vmatpush1.msra.mxu0 0.0
        %630 = vmatprep.subr.mxu0 0.0
        %631 = vmatpush1.msra.mxu0 0.0
        %632 = vmatprep.subr.mxu0 0.0
        %633 = vmatpush1.msra.mxu0 0.0
        %634 = vmatprep.subr.mxu0 0.0
        %635 = vmatpush1.msra.mxu0 0.0
        %636 = vmatprep.subr.mxu0 0.0
        %637 = vmatpush1.msra.mxu0 0.0
        %638 = vmatprep.subr.mxu0 0.0
        %639 = vmatpush1.msra.mxu0 0.0
        %640 = vmatprep.subr.mxu0 0.0
        %641 = vmatpush1.msra.mxu0 0.0
        %642 = vmatprep.subr.mxu0 0.0
        %643 = vmatpush1.msra.mxu0 0.0
        %644 = vmatprep.subr.mxu0 0.0
        %645 = vmatpush1.msra.mxu0 0.0
        %646 = vmatprep.subr.mxu0 0.0
        %647 = vmatpush1.msra.mxu0 0.0
        %648 = vmatprep.subr.mxu0 0.0
        %649 = vmatpush1.msra.mxu0 0.0
        %650 = vmatprep.subr.mxu0 0.0
        %651 = vmatpush1.msra.mxu0 0.0
        %652 = vmatprep.subr.mxu0 0.0
        %653 = vmatpush1.msra.mxu0 0.0
        %654 = vmatprep.mubr.f32.mxu0 0.0
        %655 = vmatmul.mubr.f32.gmra.mrb[0].mxu0 %v543
        %v656 = vpop.f32.mrb[0].mxu0
        %v657 = vadd.f32 %v539, %v656
        %v658 = vpop.f32.mrb[0].mxu0
        %659 = vmatprep.mubr.f32.mxu0 0.0
        %660 = vmatmul.mubr.f32.gmra.mrb[0].mxu0 %v546
        %v661 = vpop.f32.mrb[0].mxu0
        %v662 = vadd.f32 %v539, %v661
        %v663 = vpop.f32.mrb[0].mxu0
        %664 = vmatprep.mubr.f32.mxu0 0.0
        %665 = vmatmul.mubr.f32.gmra.mrb[0].mxu0 %v549
        %v666 = vpop.f32.mrb[0].mxu0
        %v667 = vadd.f32 %v539, %v666
        %v668 = vpop.f32.mrb[0].mxu0
        %669 = vmatprep.mubr.f32.mxu0 0.0
        %670 = vmatmul.mubr.f32.gmra.mrb[0].mxu0 %v552
        %v671 = vpop.f32.mrb[0].mxu0
        %v672 = vadd.f32 %v539, %v671
        %v673 = vpop.f32.mrb[0].mxu0
        %674 = vmatprep.mubr.f32.mxu0 0.0
        %675 = vmatmul.mubr.f32.gmra.mrb[0].mxu0 %v555
        %v676 = vpop.f32.mrb[0].mxu0
        %v677 = vadd.f32 %v539, %v676
        %v678 = vpop.f32.mrb[0].mxu0
        %679 = vmatprep.mubr.f32.mxu0 0.0
        %680 = vmatmul.mubr.f32.gmra.mrb[0].mxu0 %v558
        %v681 = vpop.f32.mrb[0].mxu0
        %v682 = vadd.f32 %v539, %v681
        %v683 = vpop.f32.mrb[0].mxu0
        %684 = vmatprep.mubr.f32.mxu0 0.0
        %685 = vmatmul.mubr.f32.gmra.mrb[0].mxu0 %v561
        %v686 = vpop.f32.mrb[0].mxu0
        %v687 = vadd.f32 %v539, %v686
        %v688 = vpop.f32.mrb[0].mxu0
        %689 = vmatprep.mubr.f32.mxu0 0.0
        %690 = vmatmul.mubr.f32.gmra.mrb[0].mxu0 %v564
        %v691 = vpop.f32.mrb[0].mxu0
        %v692 = vadd.f32 %v539, %v691
        %v693 = vpop.f32.mrb[0].mxu0
        %694 = vmatprep.mubr.f32.mxu0 0.0
        %695 = vmatmul.mubr.f32.gmra.mrb[0].mxu0 %v567
        %v696 = vpop.f32.mrb[0].mxu0
        %v697 = vadd.f32 %v539, %v696
        %v698 = vpop.f32.mrb[0].mxu0
        %699 = vmatprep.mubr.f32.mxu0 0.0
        %700 = vmatmul.mubr.f32.gmra.mrb[0].mxu0 %v570
        %v701 = vpop.f32.mrb[0].mxu0
        %v702 = vadd.f32 %v539, %v701
        %v703 = vpop.f32.mrb[0].mxu0
        %704 = vmatprep.mubr.f32.mxu0 0.0
        %705 = vmatmul.mubr.f32.gmra.mrb[0].mxu0 %v573
        %v706 = vpop.f32.mrb[0].mxu0
        %v707 = vadd.f32 %v539, %v706
        %v708 = vpop.f32.mrb[0].mxu0
        %709 = vmatprep.mubr.f32.mxu0 0.0
        %710 = vmatmul.mubr.f32.gmra.mrb[0].mxu0 %v576
        %v711 = vpop.f32.mrb[0].mxu0
        %v712 = vadd.f32 %v539, %v711
        %v713 = vpop.f32.mrb[0].mxu0
        %714 = vmatprep.mubr.f32.mxu0 0.0
        %715 = vmatmul.mubr.f32.gmra.mrb[0].mxu0 %v579
        %v716 = vpop.f32.mrb[0].mxu0
        %v717 = vadd.f32 %v539, %v716
        %v718 = vpop.f32.mrb[0].mxu0
        %719 = vmatprep.mubr.f32.mxu0 0.0
        %720 = vmatmul.mubr.f32.gmra.mrb[0].mxu0 %v582
        %v721 = vpop.f32.mrb[0].mxu0
        %v722 = vadd.f32 %v539, %v721
        %v723 = vpop.f32.mrb[0].mxu0
        %724 = vmatprep.mubr.f32.mxu0 0.0
        %725 = vmatmul.mubr.f32.gmra.mrb[0].mxu0 %v585
        %v726 = vpop.f32.mrb[0].mxu0
        %v727 = vadd.f32 %v539, %v726
        %v728 = vpop.f32.mrb[0].mxu0
        %729 = vmatprep.mubr.f32.mxu0 0.0
        %730 = vmatmul.mubr.f32.gmra.mrb[0].mxu0 %v588
        %v731 = vpop.f32.mrb[0].mxu0
        %v732 = vadd.f32 %v539, %v731
        %v733 = vpop.f32.mrb[0].mxu0
        %734 = vdwg.mxu0
        %v735 = vld [vmem:[%s430] sm:$0xff]
        %v736 = vld [vmem:[%s430 + $0x8] sm:$0xff]
        %v737 = vld [vmem:[%s430 + $0x10] sm:$0xff]
        %v738 = vld [vmem:[%s430 + $0x18] sm:$0xff]
        %v739 = vld [vmem:[%s430 + $0x20] sm:$0xff]
        %v740 = vld [vmem:[%s430 + $0x28] sm:$0xff]
        %v741 = vld [vmem:[%s430 + $0x30] sm:$0xff]
        %v742 = vld [vmem:[%s430 + $0x38] sm:$0xff]
        %v743 = vld [vmem:[%s430 + $0x40] sm:$0xff]
        %v744 = vld [vmem:[%s430 + $0x48] sm:$0xff]
        %v745 = vld [vmem:[%s430 + $0x50] sm:$0xff]
        %v746 = vld [vmem:[%s430 + $0x58] sm:$0xff]
        %v747 = vld [vmem:[%s430 + $0x60] sm:$0xff]
        %v748 = vld [vmem:[%s430 + $0x68] sm:$0xff]
        %v749 = vld [vmem:[%s430 + $0x70] sm:$0xff]
        %v750 = vld [vmem:[%s430 + $0x78] sm:$0xff]
        %751 = vmatprep.subr.mxu0 0.0
        %752 = vmatpush1.msra.mxu0 %v735
        %753 = vmatprep.subr.mxu0 0.0
        %754 = vmatpush1.msra.mxu0 %v736
        %755 = vmatprep.subr.mxu0 0.0
        %756 = vmatpush1.msra.mxu0 %v737
        %757 = vmatprep.subr.mxu0 0.0
        %758 = vmatpush1.msra.mxu0 %v738
        %759 = vmatprep.subr.mxu0 0.0
        %760 = vmatpush1.msra.mxu0 %v739
        %761 = vmatprep.subr.mxu0 0.0
        %762 = vmatpush1.msra.mxu0 %v740
        %763 = vmatprep.subr.mxu0 0.0
        %764 = vmatpush1.msra.mxu0 %v741
        %765 = vmatprep.subr.mxu0 0.0
        %766 = vmatpush1.msra.mxu0 %v742
        %767 = vmatprep.subr.mxu0 0.0
        %768 = vmatpush1.msra.mxu0 %v743
        %769 = vmatprep.subr.mxu0 0.0
        %770 = vmatpush1.msra.mxu0 %v744
        %771 = vmatprep.subr.mxu0 0.0
        %772 = vmatpush1.msra.mxu0 %v745
        %773 = vmatprep.subr.mxu0 0.0
        %774 = vmatpush1.msra.mxu0 %v746
        %775 = vmatprep.subr.mxu0 0.0
        %776 = vmatpush1.msra.mxu0 %v747
        %777 = vmatprep.subr.mxu0 0.0
        %778 = vmatpush1.msra.mxu0 %v748
        %779 = vmatprep.subr.mxu0 0.0
        %780 = vmatpush1.msra.mxu0 %v749
        %781 = vmatprep.subr.mxu0 0.0
        %782 = vmatpush1.msra.mxu0 %v750
        %783 = vmatprep.subr.mxu0 0.0
        %784 = vmatpush1.msra.mxu0 0.0
        %785 = vmatprep.subr.mxu0 0.0
        %786 = vmatpush1.msra.mxu0 0.0
        %787 = vmatprep.subr.mxu0 0.0
        %788 = vmatpush1.msra.mxu0 0.0
        %789 = vmatprep.subr.mxu0 0.0
        %790 = vmatpush1.msra.mxu0 0.0
        %791 = vmatprep.subr.mxu0 0.0
        %792 = vmatpush1.msra.mxu0 0.0
        %793 = vmatprep.subr.mxu0 0.0
        %794 = vmatpush1.msra.mxu0 0.0
        %795 = vmatprep.subr.mxu0 0.0
        %796 = vmatpush1.msra.mxu0 0.0
        %797 = vmatprep.subr.mxu0 0.0
        %798 = vmatpush1.msra.mxu0 0.0
        %799 = vmatprep.subr.mxu0 0.0
        %800 = vmatpush1.msra.mxu0 0.0
        %801 = vmatprep.subr.mxu0 0.0
        %802 = vmatpush1.msra.mxu0 0.0
        %803 = vmatprep.subr.mxu0 0.0
        %804 = vmatpush1.msra.mxu0 0.0
        %805 = vmatprep.subr.mxu0 0.0
        %806 = vmatpush1.msra.mxu0 0.0
        %807 = vmatprep.subr.mxu0 0.0
        %808 = vmatpush1.msra.mxu0 0.0
        %809 = vmatprep.subr.mxu0 0.0
        %810 = vmatpush1.msra.mxu0 0.0
        %811 = vmatprep.subr.mxu0 0.0
        %812 = vmatpush1.msra.mxu0 0.0
        %813 = vmatprep.subr.mxu0 0.0
        %814 = vmatpush1.msra.mxu0 0.0
        %815 = vmatprep.mubr.f32.mxu0 0.0
        %816 = vmatmul.mubr.f32.gmra.mrb[0].mxu0 %v657
        %v817 = vpop.f32.mrb[0].mxu0
        %v818 = vadd.f32 0.0, %v817
        %v819 = vpop.f32.mrb[0].mxu0
        %820 = vmatprep.mubr.f32.mxu0 0.0
        %821 = vmatmul.mubr.f32.gmra.mrb[0].mxu0 %v662
        %v822 = vpop.f32.mrb[0].mxu0
        %v823 = vadd.f32 0.0, %v822
        %v824 = vpop.f32.mrb[0].mxu0
        %825 = vmatprep.mubr.f32.mxu0 0.0
        %826 = vmatmul.mubr.f32.gmra.mrb[0].mxu0 %v667
        %v827 = vpop.f32.mrb[0].mxu0
        %v828 = vadd.f32 0.0, %v827
        %v829 = vpop.f32.mrb[0].mxu0
        %830 = vmatprep.mubr.f32.mxu0 0.0
        %831 = vmatmul.mubr.f32.gmra.mrb[0].mxu0 %v672
        %v832 = vpop.f32.mrb[0].mxu0
        %v833 = vadd.f32 0.0, %v832
        %v834 = vpop.f32.mrb[0].mxu0
        %835 = vmatprep.mubr.f32.mxu0 0.0
        %836 = vmatmul.mubr.f32.gmra.mrb[0].mxu0 %v677
        %v837 = vpop.f32.mrb[0].mxu0
        %v838 = vadd.f32 0.0, %v837
        %v839 = vpop.f32.mrb[0].mxu0
        %840 = vmatprep.mubr.f32.mxu0 0.0
        %841 = vmatmul.mubr.f32.gmra.mrb[0].mxu0 %v682
        %v842 = vpop.f32.mrb[0].mxu0
        %v843 = vadd.f32 0.0, %v842
        %v844 = vpop.f32.mrb[0].mxu0
        %845 = vmatprep.mubr.f32.mxu0 0.0
        %846 = vmatmul.mubr.f32.gmra.mrb[0].mxu0 %v687
        %v847 = vpop.f32.mrb[0].mxu0
        %v848 = vadd.f32 0.0, %v847
        %v849 = vpop.f32.mrb[0].mxu0
        %850 = vmatprep.mubr.f32.mxu0 0.0
        %851 = vmatmul.mubr.f32.gmra.mrb[0].mxu0 %v692
        %v852 = vpop.f32.mrb[0].mxu0
        %v853 = vadd.f32 0.0, %v852
        %v854 = vpop.f32.mrb[0].mxu0
        %855 = vmatprep.mubr.f32.mxu0 0.0
        %856 = vmatmul.mubr.f32.gmra.mrb[0].mxu0 %v697
        %v857 = vpop.f32.mrb[0].mxu0
        %v858 = vadd.f32 0.0, %v857
        %v859 = vpop.f32.mrb[0].mxu0
        %860 = vmatprep.mubr.f32.mxu0 0.0
        %861 = vmatmul.mubr.f32.gmra.mrb[0].mxu0 %v702
        %v862 = vpop.f32.mrb[0].mxu0
        %v863 = vadd.f32 0.0, %v862
        %v864 = vpop.f32.mrb[0].mxu0
        %865 = vmatprep.mubr.f32.mxu0 0.0
        %866 = vmatmul.mubr.f32.gmra.mrb[0].mxu0 %v707
        %v867 = vpop.f32.mrb[0].mxu0
        %v868 = vadd.f32 0.0, %v867
        %v869 = vpop.f32.mrb[0].mxu0
        %870 = vmatprep.mubr.f32.mxu0 0.0
        %871 = vmatmul.mubr.f32.gmra.mrb[0].mxu0 %v712
        %v872 = vpop.f32.mrb[0].mxu0
        %v873 = vadd.f32 0.0, %v872
        %v874 = vpop.f32.mrb[0].mxu0
        %875 = vmatprep.mubr.f32.mxu0 0.0
        %876 = vmatmul.mubr.f32.gmra.mrb[0].mxu0 %v717
        %v877 = vpop.f32.mrb[0].mxu0
        %v878 = vadd.f32 0.0, %v877
        %v879 = vpop.f32.mrb[0].mxu0
        %880 = vmatprep.mubr.f32.mxu0 0.0
        %881 = vmatmul.mubr.f32.gmra.mrb[0].mxu0 %v722
        %v882 = vpop.f32.mrb[0].mxu0
        %v883 = vadd.f32 0.0, %v882
        %v884 = vpop.f32.mrb[0].mxu0
        %885 = vmatprep.mubr.f32.mxu0 0.0
        %886 = vmatmul.mubr.f32.gmra.mrb[0].mxu0 %v727
        %v887 = vpop.f32.mrb[0].mxu0
        %v888 = vadd.f32 0.0, %v887
        %v889 = vpop.f32.mrb[0].mxu0
        %890 = vmatprep.mubr.f32.mxu0 0.0
        %891 = vmatmul.mubr.f32.gmra.mrb[0].mxu0 %v732
        %v892 = vpop.f32.mrb[0].mxu0
        %v893 = vadd.f32 0.0, %v892
        %v894 = vpop.f32.mrb[0].mxu0
        %895 = vdwg.mxu0
        %v896 = vld [vmem:[%s412] sm:$0x1]
        %v897 = vld [vmem:[%s412 + $0x1] sm:$0x1]
        %v898 = vld [vmem:[%s412 + $0x2] sm:$0x1]
        %v899 = vld [vmem:[%s412 + $0x3] sm:$0x1]
        %v900 = vld [vmem:[%s412 + $0x4] sm:$0x1]
        %v901 = vld [vmem:[%s412 + $0x5] sm:$0x1]
        %v902 = vld [vmem:[%s412 + $0x6] sm:$0x1]
        %v903 = vld [vmem:[%s412 + $0x7] sm:$0x1]
        %v912 = vlaneseq
        %v913 = vshrl.u32 %v912, 7
        %v914 = vsub.s32 0, %v913
        %v915 = vrot.slane %v896, %v914
        %v916 = vlaneseq
        %v917 = vshrl.u32 %v916, 7
        %v918 = vsub.s32 0, %v917
        %v919 = vrot.slane %v897, %v918
        %v920 = vlaneseq
        %v921 = vshrl.u32 %v920, 7
        %v922 = vsub.s32 0, %v921
        %v923 = vrot.slane %v898, %v922
        %v924 = vlaneseq
        %v925 = vshrl.u32 %v924, 7
        %v926 = vsub.s32 0, %v925
        %v927 = vrot.slane %v899, %v926
        %v928 = vlaneseq
        %v929 = vshrl.u32 %v928, 7
        %v930 = vsub.s32 0, %v929
        %v931 = vrot.slane %v900, %v930
        %v932 = vlaneseq
        %v933 = vshrl.u32 %v932, 7
        %v934 = vsub.s32 0, %v933
        %v935 = vrot.slane %v901, %v934
        %v936 = vlaneseq
        %v937 = vshrl.u32 %v936, 7
        %v938 = vsub.s32 0, %v937
        %v939 = vrot.slane %v902, %v938
        %v940 = vlaneseq
        %v941 = vshrl.u32 %v940, 7
        %v942 = vsub.s32 0, %v941
        %v943 = vrot.slane %v903, %v942
        %v952 = vadd.f32 %v818, %v915
        %v953 = vadd.f32 %v823, %v915
        %v954 = vadd.f32 %v828, %v919
        %v955 = vadd.f32 %v833, %v919
        %v956 = vadd.f32 %v838, %v923
        %v957 = vadd.f32 %v843, %v923
        %v958 = vadd.f32 %v848, %v927
        %v959 = vadd.f32 %v853, %v927
        %v960 = vadd.f32 %v858, %v931
        %v961 = vadd.f32 %v863, %v931
        %v962 = vadd.f32 %v868, %v935
        %v963 = vadd.f32 %v873, %v935
        %v964 = vadd.f32 %v878, %v939
        %v965 = vadd.f32 %v883, %v939
        %v966 = vadd.f32 %v888, %v943
        %v967 = vadd.f32 %v893, %v943
        %v968 = vsub.f32 0.0, %v952
        %v969 = vsub.f32 0.0, %v953
        %v970 = vsub.f32 0.0, %v954
        %v971 = vsub.f32 0.0, %v955
        %v972 = vsub.f32 0.0, %v956
        %v973 = vsub.f32 0.0, %v957
        %v974 = vsub.f32 0.0, %v958
        %v975 = vsub.f32 0.0, %v959
        %v976 = vsub.f32 0.0, %v960
        %v977 = vsub.f32 0.0, %v961
        %v978 = vsub.f32 0.0, %v962
        %v979 = vsub.f32 0.0, %v963
        %v980 = vsub.f32 0.0, %v964
        %v981 = vsub.f32 0.0, %v965
        %v982 = vsub.f32 0.0, %v966
        %v983 = vsub.f32 0.0, %v967
        %v984 = vmul.f32 %v968, 1.442695
        %v985 = vpow.pop %v984
        %v986 = vmul.f32 %v969, 1.442695
        %v987 = vpow.pop %v986
        %v988 = vmul.f32 %v970, 1.442695
        %v989 = vpow.pop %v988
        %v990 = vmul.f32 %v971, 1.442695
        %v991 = vpow.pop %v990
        %v992 = vmul.f32 %v972, 1.442695
        %v993 = vpow.pop %v992
        %v994 = vmul.f32 %v973, 1.442695
        %v995 = vpow.pop %v994
        %v996 = vmul.f32 %v974, 1.442695
        %v997 = vpow.pop %v996
        %v998 = vmul.f32 %v975, 1.442695
        %v999 = vpow.pop %v998
        %v1000 = vmul.f32 %v976, 1.442695
        %v1001 = vpow.pop %v1000
        %v1002 = vmul.f32 %v977, 1.442695
        %v1003 = vpow.pop %v1002
        %v1004 = vmul.f32 %v978, 1.442695
        %v1005 = vpow.pop %v1004
        %v1006 = vmul.f32 %v979, 1.442695
        %v1007 = vpow.pop %v1006
        %v1008 = vmul.f32 %v980, 1.442695
        %v1009 = vpow.pop %v1008
        %v1010 = vmul.f32 %v981, 1.442695
        %v1011 = vpow.pop %v1010
        %v1012 = vmul.f32 %v982, 1.442695
        %v1013 = vpow.pop %v1012
        %v1014 = vmul.f32 %v983, 1.442695
        %v1015 = vpow.pop %v1014
        %v1016 = vadd.f32 %v985, 1.0
        %v1017 = vadd.f32 %v987, 1.0
        %v1018 = vadd.f32 %v989, 1.0
        %v1019 = vadd.f32 %v991, 1.0
        %v1020 = vadd.f32 %v993, 1.0
        %v1021 = vadd.f32 %v995, 1.0
        %v1022 = vadd.f32 %v997, 1.0
        %v1023 = vadd.f32 %v999, 1.0
        %v1024 = vadd.f32 %v1001, 1.0
        %v1025 = vadd.f32 %v1003, 1.0
        %v1026 = vadd.f32 %v1005, 1.0
        %v1027 = vadd.f32 %v1007, 1.0
        %v1028 = vadd.f32 %v1009, 1.0
        %v1029 = vadd.f32 %v1011, 1.0
        %v1030 = vadd.f32 %v1013, 1.0
        %v1031 = vadd.f32 %v1015, 1.0
        %v1032 = vrcp.pop %v1016
        %v1033 = vmul.f32 1.0, %v1032
        %v1034 = vrcp.pop %v1017
        %v1035 = vmul.f32 1.0, %v1034
        %v1036 = vrcp.pop %v1018
        %v1037 = vmul.f32 1.0, %v1036
        %v1038 = vrcp.pop %v1019
        %v1039 = vmul.f32 1.0, %v1038
        %v1040 = vrcp.pop %v1020
        %v1041 = vmul.f32 1.0, %v1040
        %v1042 = vrcp.pop %v1021
        %v1043 = vmul.f32 1.0, %v1042
        %v1044 = vrcp.pop %v1022
        %v1045 = vmul.f32 1.0, %v1044
        %v1046 = vrcp.pop %v1023
        %v1047 = vmul.f32 1.0, %v1046
        %v1048 = vrcp.pop %v1024
        %v1049 = vmul.f32 1.0, %v1048
        %v1050 = vrcp.pop %v1025
        %v1051 = vmul.f32 1.0, %v1050
        %v1052 = vrcp.pop %v1026
        %v1053 = vmul.f32 1.0, %v1052
        %v1054 = vrcp.pop %v1027
        %v1055 = vmul.f32 1.0, %v1054
        %v1056 = vrcp.pop %v1028
        %v1057 = vmul.f32 1.0, %v1056
        %v1058 = vrcp.pop %v1029
        %v1059 = vmul.f32 1.0, %v1058
        %v1060 = vrcp.pop %v1030
        %v1061 = vmul.f32 1.0, %v1060
        %v1062 = vrcp.pop %v1031
        %v1063 = vmul.f32 1.0, %v1062
        %v1064 = vmul.f32 %v952, %v1033
        %v1065 = vmul.f32 %v953, %v1035
        %v1066 = vmul.f32 %v954, %v1037
        %v1067 = vmul.f32 %v955, %v1039
        %v1068 = vmul.f32 %v956, %v1041
        %v1069 = vmul.f32 %v957, %v1043
        %v1070 = vmul.f32 %v958, %v1045
        %v1071 = vmul.f32 %v959, %v1047
        %v1072 = vmul.f32 %v960, %v1049
        %v1073 = vmul.f32 %v961, %v1051
        %v1074 = vmul.f32 %v962, %v1053
        %v1075 = vmul.f32 %v963, %v1055
        %v1076 = vmul.f32 %v964, %v1057
        %v1077 = vmul.f32 %v965, %v1059
        %v1078 = vmul.f32 %v966, %v1061
        %v1079 = vmul.f32 %v967, %v1063
        %v1080 = vld [vmem:[%s439] sm:$0xff]
        %v1081 = vld [vmem:[%s439 + $0x8] sm:$0xff]
        %v1082 = vld [vmem:[%s439 + $0x10] sm:$0xff]
        %v1083 = vld [vmem:[%s439 + $0x18] sm:$0xff]
        %v1084 = vld [vmem:[%s439 + $0x20] sm:$0xff]
        %v1085 = vld [vmem:[%s439 + $0x28] sm:$0xff]
        %v1086 = vld [vmem:[%s439 + $0x30] sm:$0xff]
        %v1087 = vld [vmem:[%s439 + $0x38] sm:$0xff]
        %v1088 = vld [vmem:[%s439 + $0x40] sm:$0xff]
        %v1089 = vld [vmem:[%s439 + $0x48] sm:$0xff]
        %v1090 = vld [vmem:[%s439 + $0x50] sm:$0xff]
        %v1091 = vld [vmem:[%s439 + $0x58] sm:$0xff]
        %v1092 = vld [vmem:[%s439 + $0x60] sm:$0xff]
        %v1093 = vld [vmem:[%s439 + $0x68] sm:$0xff]
        %v1094 = vld [vmem:[%s439 + $0x70] sm:$0xff]
        %v1095 = vld [vmem:[%s439 + $0x78] sm:$0xff]
        %v1096 = vld [vmem:[%s511] sm:$0x1]
        %v1098 = vlaneseq
        %v1099 = vshrl.u32 %v1098, 7
        %v1100 = vsub.s32 0, %v1099
        %v1101 = vrot.slane %v1096, %v1100
        %1103 = vmatprep.subr.mxu0 0.0
        %1104 = vmatpush1.msra.mxu0 %v1080
        %1105 = vmatprep.subr.mxu0 0.0
        %1106 = vmatpush1.msra.mxu0 %v1081
        %1107 = vmatprep.subr.mxu0 0.0
        %1108 = vmatpush1.msra.mxu0 %v1082
        %1109 = vmatprep.subr.mxu0 0.0
        %1110 = vmatpush1.msra.mxu0 %v1083
        %1111 = vmatprep.subr.mxu0 0.0
        %1112 = vmatpush1.msra.mxu0 %v1084
        %1113 = vmatprep.subr.mxu0 0.0
        %1114 = vmatpush1.msra.mxu0 %v1085
        %1115 = vmatprep.subr.mxu0 0.0
        %1116 = vmatpush1.msra.mxu0 %v1086
        %1117 = vmatprep.subr.mxu0 0.0
        %1118 = vmatpush1.msra.mxu0 %v1087
        %1119 = vmatprep.subr.mxu0 0.0
        %1120 = vmatpush1.msra.mxu0 %v1088
        %1121 = vmatprep.subr.mxu0 0.0
        %1122 = vmatpush1.msra.mxu0 %v1089
        %1123 = vmatprep.subr.mxu0 0.0
        %1124 = vmatpush1.msra.mxu0 %v1090
        %1125 = vmatprep.subr.mxu0 0.0
        %1126 = vmatpush1.msra.mxu0 %v1091
        %1127 = vmatprep.subr.mxu0 0.0
        %1128 = vmatpush1.msra.mxu0 %v1092
        %1129 = vmatprep.subr.mxu0 0.0
        %1130 = vmatpush1.msra.mxu0 %v1093
        %1131 = vmatprep.subr.mxu0 0.0
        %1132 = vmatpush1.msra.mxu0 %v1094
        %1133 = vmatprep.subr.mxu0 0.0
        %1134 = vmatpush1.msra.mxu0 %v1095
        %1135 = vmatprep.subr.mxu0 0.0
        %1136 = vmatpush1.msra.mxu0 0.0
        %1137 = vmatprep.subr.mxu0 0.0
        %1138 = vmatpush1.msra.mxu0 0.0
        %1139 = vmatprep.subr.mxu0 0.0
        %1140 = vmatpush1.msra.mxu0 0.0
        %1141 = vmatprep.subr.mxu0 0.0
        %1142 = vmatpush1.msra.mxu0 0.0
        %1143 = vmatprep.subr.mxu0 0.0
        %1144 = vmatpush1.msra.mxu0 0.0
        %1145 = vmatprep.subr.mxu0 0.0
        %1146 = vmatpush1.msra.mxu0 0.0
        %1147 = vmatprep.subr.mxu0 0.0
        %1148 = vmatpush1.msra.mxu0 0.0
        %1149 = vmatprep.subr.mxu0 0.0
        %1150 = vmatpush1.msra.mxu0 0.0
        %1151 = vmatprep.subr.mxu0 0.0
        %1152 = vmatpush1.msra.mxu0 0.0
        %1153 = vmatprep.subr.mxu0 0.0
        %1154 = vmatpush1.msra.mxu0 0.0
        %1155 = vmatprep.subr.mxu0 0.0
        %1156 = vmatpush1.msra.mxu0 0.0
        %1157 = vmatprep.subr.mxu0 0.0
        %1158 = vmatpush1.msra.mxu0 0.0
        %1159 = vmatprep.subr.mxu0 0.0
        %1160 = vmatpush1.msra.mxu0 0.0
        %1161 = vmatprep.subr.mxu0 0.0
        %1162 = vmatpush1.msra.mxu0 0.0
        %1163 = vmatprep.subr.mxu0 0.0
        %1164 = vmatpush1.msra.mxu0 0.0
        %1165 = vmatprep.subr.mxu0 0.0
        %1166 = vmatpush1.msra.mxu0 0.0
        %1167 = vmatprep.mubr.f32.mxu0 0.0
        %1168 = vmatmul.mubr.f32.gmra.mrb[0].mxu0 %v1064
        %v1169 = vpop.f32.mrb[0].mxu0
        %v1170 = vadd.f32 %v1101, %v1169
        %v1171 = vpop.f32.mrb[0].mxu0
        %1172 = vmatprep.mubr.f32.mxu0 0.0
        %1173 = vmatmul.mubr.f32.gmra.mrb[0].mxu0 %v1065
        %v1174 = vpop.f32.mrb[0].mxu0
        %v1175 = vadd.f32 %v1101, %v1174
        %v1176 = vpop.f32.mrb[0].mxu0
        %1177 = vmatprep.mubr.f32.mxu0 0.0
        %1178 = vmatmul.mubr.f32.gmra.mrb[0].mxu0 %v1066
        %v1179 = vpop.f32.mrb[0].mxu0
        %v1180 = vadd.f32 %v1101, %v1179
        %v1181 = vpop.f32.mrb[0].mxu0
        %1182 = vmatprep.mubr.f32.mxu0 0.0
        %1183 = vmatmul.mubr.f32.gmra.mrb[0].mxu0 %v1067
        %v1184 = vpop.f32.mrb[0].mxu0
        %v1185 = vadd.f32 %v1101, %v1184
        %v1186 = vpop.f32.mrb[0].mxu0
        %1187 = vmatprep.mubr.f32.mxu0 0.0
        %1188 = vmatmul.mubr.f32.gmra.mrb[0].mxu0 %v1068
        %v1189 = vpop.f32.mrb[0].mxu0
        %v1190 = vadd.f32 %v1101, %v1189
        %v1191 = vpop.f32.mrb[0].mxu0
        %1192 = vmatprep.mubr.f32.mxu0 0.0
        %1193 = vmatmul.mubr.f32.gmra.mrb[0].mxu0 %v1069
        %v1194 = vpop.f32.mrb[0].mxu0
        %v1195 = vadd.f32 %v1101, %v1194
        %v1196 = vpop.f32.mrb[0].mxu0
        %1197 = vmatprep.mubr.f32.mxu0 0.0
        %1198 = vmatmul.mubr.f32.gmra.mrb[0].mxu0 %v1070
        %v1199 = vpop.f32.mrb[0].mxu0
        %v1200 = vadd.f32 %v1101, %v1199
        %v1201 = vpop.f32.mrb[0].mxu0
        %1202 = vmatprep.mubr.f32.mxu0 0.0
        %1203 = vmatmul.mubr.f32.gmra.mrb[0].mxu0 %v1071
        %v1204 = vpop.f32.mrb[0].mxu0
        %v1205 = vadd.f32 %v1101, %v1204
        %v1206 = vpop.f32.mrb[0].mxu0
        %1207 = vmatprep.mubr.f32.mxu0 0.0
        %1208 = vmatmul.mubr.f32.gmra.mrb[0].mxu0 %v1072
        %v1209 = vpop.f32.mrb[0].mxu0
        %v1210 = vadd.f32 %v1101, %v1209
        %v1211 = vpop.f32.mrb[0].mxu0
        %1212 = vmatprep.mubr.f32.mxu0 0.0
        %1213 = vmatmul.mubr.f32.gmra.mrb[0].mxu0 %v1073
        %v1214 = vpop.f32.mrb[0].mxu0
        %v1215 = vadd.f32 %v1101, %v1214
        %v1216 = vpop.f32.mrb[0].mxu0
        %1217 = vmatprep.mubr.f32.mxu0 0.0
        %1218 = vmatmul.mubr.f32.gmra.mrb[0].mxu0 %v1074
        %v1219 = vpop.f32.mrb[0].mxu0
        %v1220 = vadd.f32 %v1101, %v1219
        %v1221 = vpop.f32.mrb[0].mxu0
        %1222 = vmatprep.mubr.f32.mxu0 0.0
        %1223 = vmatmul.mubr.f32.gmra.mrb[0].mxu0 %v1075
        %v1224 = vpop.f32.mrb[0].mxu0
        %v1225 = vadd.f32 %v1101, %v1224
        %v1226 = vpop.f32.mrb[0].mxu0
        %1227 = vmatprep.mubr.f32.mxu0 0.0
        %1228 = vmatmul.mubr.f32.gmra.mrb[0].mxu0 %v1076
        %v1229 = vpop.f32.mrb[0].mxu0
        %v1230 = vadd.f32 %v1101, %v1229
        %v1231 = vpop.f32.mrb[0].mxu0
        %1232 = vmatprep.mubr.f32.mxu0 0.0
        %1233 = vmatmul.mubr.f32.gmra.mrb[0].mxu0 %v1077
        %v1234 = vpop.f32.mrb[0].mxu0
        %v1235 = vadd.f32 %v1101, %v1234
        %v1236 = vpop.f32.mrb[0].mxu0
        %1237 = vmatprep.mubr.f32.mxu0 0.0
        %1238 = vmatmul.mubr.f32.gmra.mrb[0].mxu0 %v1078
        %v1239 = vpop.f32.mrb[0].mxu0
        %v1240 = vadd.f32 %v1101, %v1239
        %v1241 = vpop.f32.mrb[0].mxu0
        %1242 = vmatprep.mubr.f32.mxu0 0.0
        %1243 = vmatmul.mubr.f32.gmra.mrb[0].mxu0 %v1079
        %v1244 = vpop.f32.mrb[0].mxu0
        %v1245 = vadd.f32 %v1101, %v1244
        %v1246 = vpop.f32.mrb[0].mxu0
        %1247 = vdwg.mxu0
        %1248 = vst [vmem:[%s497] sm:$0xff] %v1170
        %1249 = vst [vmem:[%s497 + $0x8] sm:$0xff] %v1175
        %1250 = vst [vmem:[%s497 + $0x10] sm:$0xff] %v1180
        %1251 = vst [vmem:[%s497 + $0x18] sm:$0xff] %v1185
        %1252 = vst [vmem:[%s497 + $0x20] sm:$0xff] %v1190
        %1253 = vst [vmem:[%s497 + $0x28] sm:$0xff] %v1195
        %1254 = vst [vmem:[%s497 + $0x30] sm:$0xff] %v1200
        %1255 = vst [vmem:[%s497 + $0x38] sm:$0xff] %v1205
        %1256 = vst [vmem:[%s497 + $0x40] sm:$0xff] %v1210
        %1257 = vst [vmem:[%s497 + $0x48] sm:$0xff] %v1215
        %1258 = vst [vmem:[%s497 + $0x50] sm:$0xff] %v1220
        %1259 = vst [vmem:[%s497 + $0x58] sm:$0xff] %v1225
        %1260 = vst [vmem:[%s497 + $0x60] sm:$0xff] %v1230
        %1261 = vst [vmem:[%s497 + $0x68] sm:$0xff] %v1235
        %1262 = vst [vmem:[%s497 + $0x70] sm:$0xff] %v1240
        %1263 = vst [vmem:[%s497 + $0x78] sm:$0xff] %v1245
        %s1264 = sand.u32 %s235, 1
        %s1265 = scalar_lea.sflag [#allocation6], %s1264
        %s1266 = sand.u32 %s235, 1
        %s1267 = smul.addr %s1266, 128
        %s1268 = scalar_lea.vmem [#allocation13], %s1267
        // Predicated region
        $region69: #{tpu_custom_call.1} parent=47 // pred_check
          %p1269 = pneg %p245
        $region70: #{tpu_custom_call.1} parent=47 // pred_check_branch
          %1271 = sbr.rel (%p1269) target = $region72
        $region71: #{tpu_custom_call.1} parent=47 // pred_region
          %s1272 = smul.u32 8, %s35
          %s1274 = ssub.s32 2048, 2048
          %1275 = vsyncadd %s1265, %s1274
          %s1276 = smul.addr %s1272, 2
          %s1277 = smul.addr %s1276, 128
          %s1278 = scalar_lea.hbm %s8, %s1277
          %s1279 = sshll.u32 %s1268, 4
          %s1280 = int_to_ptr.vmem [resolvable:$true] %s1279
          %1285 = dma.vmem_to_hbm [thread:$0]  %s1280, 2048, %s1278, %s1265, 128, 128, 8
        $region72: #{tpu_custom_call.1} parent=47 // pred_fallthru
          _
      $region48: #{tpu_custom_call.1} parent=5 // pred_fallthru
        _
      %p1286 = scmp.le.s32.totalorder 2, %s30
      // Predicated region
      $region73: #{tpu_custom_call.1} parent=5 // pred_check
        %p1287 = pneg %p1286
      $region74: #{tpu_custom_call.1} parent=5 // pred_check_branch
        %1289 = sbr.rel (%p1287) target = $region76
      $region75: #{tpu_custom_call.1} parent=5 // pred_region
        %s1290 = ssub.s32 %s30, 2
        // Predicated region
        $region77: #{tpu_custom_call.1} parent=75 // pred_check
          %p1291 = pneg %p251
        $region78: #{tpu_custom_call.1} parent=75 // pred_check_branch
          %1293 = sbr.rel (%p1291) target = $region80
        $region79: #{tpu_custom_call.1} parent=75 // pred_region
          %s1294 = sand.u32 %s236, 1
          %s1295 = scalar_lea.sflag [#allocation6], %s1294
          %s1296 = sand.u32 %s236, 1
          %s1297 = smul.addr %s1296, 128
          %s1298 = scalar_lea.vmem [#allocation13], %s1297
          %1299 = dma.done %s1295, 2048
        $region80: #{tpu_custom_call.1} parent=75 // pred_fallthru
          _
      $region76: #{tpu_custom_call.1} parent=5 // pred_fallthru
        _
    $region6: #{tpu_custom_call.1} parent=1 // loop_footer
      %s34 = sadd.s32 1, %s30
    $region7: #{tpu_custom_call.1} parent=1 // loop_footer_branch
      %29 = sbr.rel target = $region3
    $region8: #{tpu_custom_call.1} parent=1 // loop_exit
      _
    %1300 = vsyncpa [#allocation5], 1
    %s1301 = scalar_lea.sflag [#allocation5], 1
    %1302 = vsyncpa %s1301, 1
    %1303 = vsyncpa [#allocation8], 1
    %s1304 = scalar_lea.sflag [#allocation8], 1
    %1305 = vsyncpa %s1304, 1
    %1306 = vsyncpa [#allocation11], 1
    %s1307 = scalar_lea.sflag [#allocation11], 1
    %1308 = vsyncpa %s1307, 1
    %1309 = vsyncpa [#allocation6], 1
    %s1310 = scalar_lea.sflag [#allocation6], 1
    %1311 = vsyncpa %s1310, 1

</llo_original>
